<compile_context>
chip_gen: v6e
topology: v6e:2x2x1
jax: 0.10.0
libtpu: 0.0.40
codegen_flags: <defaults>
</compile_context>

<pallas_src>
import numpy as np
import jax
import jax.numpy as jnp
from jax.experimental import pallas as pl
from jax.experimental.pallas import tpu as pltpu

BN_EPS = 1e-5                 # torch.nn.BatchNorm1d default eps
SOFTPLUS_THRESHOLD = 20.0     # torch F.softplus default threshold
LANE = 128
SUBLANE = 8


def _round_up(x, m):
    return (x + m - 1) // m * m


def solve_neuron_n():
    """Analytic version of FullyNet.solve_neuron_n: 10171*x + 12*(x^2 + x) = 714077."""
    a, b, c = 12.0, 10183.0, -714077.0
    return int((-b + np.sqrt(b * b - 4.0 * a * c)) / (2.0 * a))


# ------------------------------ Pallas kernel ------------------------------- #
def _fully_chain_kernel(x0_ref, w_ref, p_ref, out_ref, state_ref):
    """One grid step = one (batch_tile, layer) cell of the Linear->Mish->BN chain.

    x0_ref    : (TB, K_pad) f32     flattened + zero-padded input features
    w_ref     : (K_pad, H_pad) bf16 this layer's zero-padded weight (in, out)
    p_ref     : (8, H_pad) f32      row0 = bias, row1 = BN scale, row2 = BN shift
    out_ref   : (TB, H_pad) f32     network output (written on the last layer)
    state_ref : (TB, K_pad) f32     VMEM scratch carrying the running activation
    """
    l = pl.program_id(1)

    @pl.when(l == 0)
    def _():
        state_ref[...] = x0_ref[...]

    x = state_ref[...].astype(jnp.bfloat16)
    y = jnp.dot(x, w_ref[...], preferred_element_type=jnp.float32)
    y = y + p_ref[0:1, :]                                     # bias

    # Mish = y * tanh(softplus(y)); torch softplus threshold at 20 (no extra clamp needed:
    # the untaken exp branch cannot produce NaN and is discarded by the select).
    sp = jnp.where(y > SOFTPLUS_THRESHOLD, y, jnp.log1p(jnp.exp(y)))
    state = y * jnp.tanh(sp)

    # Folded eval-mode BatchNorm1d (padded lanes have scale=shift=0 -> stay exactly 0).
    state = state * p_ref[1:2, :] + p_ref[2:3, :]
    # TODO(synk): nn.Dropout is stochastic in torch training mode; modeled here as
    # eval-mode identity (deterministic inference forward).

    # Carry to the next layer (columns >= H_pad keep old contents; the matching weight
    # rows of every later layer are zero-padded, so they never contribute).
    h_pad = state.shape[1]
    state_ref[:, 0:h_pad] = state

    @pl.when(l == pl.num_programs(1) - 1)
    def _():
        out_ref[...] = state


def fully_net_forward(x_flat, w_slab, p_slab, *, batch, hidden_n, batch_tile=128):
    """Run the entire Linear->Mish->BN chain in ONE gridded pallas_call."""
    layer_n, k_pad, h_pad = w_slab.shape
    tb = min(batch_tile, _round_up(batch, SUBLANE))
    b_pad = _round_up(batch, tb)
    nb = b_pad // tb

    # Lane-dense, zero-padded input slab (B_pad, K_pad).
    x0 = jnp.zeros((b_pad, k_pad), jnp.float32)
    x0 = x0.at[:batch, :x_flat.shape[1]].set(x_flat.astype(jnp.float32))

    out = pl.pallas_call(
        _fully_chain_kernel,
        out_shape=jax.ShapeDtypeStruct((b_pad, h_pad), jnp.float32),
        grid_spec=pltpu.PrefetchScalarGridSpec(
            num_scalar_prefetch=0,
            grid=(nb, layer_n),
            in_specs=[
                pl.BlockSpec((tb, k_pad), lambda b, l: (b, 0)),            # x0 (per batch tile)
                pl.BlockSpec((None, k_pad, h_pad), lambda b, l: (l, 0, 0)),  # weight stream
                pl.BlockSpec((None, SUBLANE, h_pad), lambda b, l: (l, 0, 0)),  # bias/scale/shift
            ],
            out_specs=pl.BlockSpec((tb, h_pad), lambda b, l: (b, 0)),
            scratch_shapes=[pltpu.VMEM((tb, k_pad), jnp.float32)],
        ),
        compiler_params=pltpu.CompilerParams(
            dimension_semantics=("parallel", "arbitrary")),
    )(x0, w_slab, p_slab)
    return out[:batch, :hidden_n]


# --------------------------- FullyNet equivalent ---------------------------- #
class FullyNetPallas:
    """Pallas equivalent of FullyNet built via _build_layers_fully with
    use_average_neuron_n=True: `layer_n` Linear->Mish->BatchNorm1d->Dropout layers of
    uniform width `hidden_n`; forward returns the last layer's state."""

    def __init__(self, n_genes, gene_dim, hidden_n=None, layer_n=13,
                 output_dim=2, dropout_p=0.1, key=None, batch_tile=128):
        self.n_genes = n_genes
        self.gene_dim = gene_dim
        self.input_dim = n_genes * gene_dim       # flattened width fed to fully_0
        self.hidden_n = hidden_n if hidden_n is not None else solve_neuron_n()
        self.layer_n = layer_n
        self.output_dim = output_dim              # unused by forward (parity with torch)
        self.dropout_p = dropout_p
        self.batch_tile = batch_tile

        h = self.hidden_n
        self.k_pad = _round_up(max(self.input_dim, h), LANE)
        self.h_pad = _round_up(h, LANE)

        key = key if key is not None else jax.random.PRNGKey(42)
        self.layers = []                                            # unpadded f32 params (reference)
        w_slab = np.zeros((layer_n, self.k_pad, self.h_pad), np.float32)
        p_slab = np.zeros((layer_n, SUBLANE, self.h_pad), np.float32)
        for l in range(layer_n):
            in_f = self.input_dim if l == 0 else h
            key, kw, kb, kg, kbe, km, kv = jax.random.split(key, 7)
            bound = 1.0 / np.sqrt(in_f)
            w = jax.random.uniform(kw, (in_f, h), jnp.float32, -bound, bound)
            b = jax.random.uniform(kb, (h,), jnp.float32, -bound, bound)
            gamma = jax.random.uniform(kg, (h,), jnp.float32, 0.5, 1.5)
            beta = 0.1 * jax.random.normal(kbe, (h,), jnp.float32)
            mean = 0.1 * jax.random.normal(km, (h,), jnp.float32)
            var = jax.random.uniform(kv, (h,), jnp.float32, 0.5, 1.5)
            self.layers.append(dict(w=w, b=b, gamma=gamma, beta=beta, mean=mean, var=var))

            # Packed / host-folded kernel parameters.
            scale = gamma / jnp.sqrt(var + BN_EPS)
            shift = beta - mean * scale
            w_slab[l, :in_f, :h] = np.asarray(w)
            p_slab[l, 0, :h] = np.asarray(b)
            p_slab[l, 1, :h] = np.asarray(scale)
            p_slab[l, 2, :h] = np.asarray(shift)

        self.w_slab = jnp.asarray(w_slab, jnp.bfloat16)   # bf16 MXU weight stream
        self.p_slab = jnp.asarray(p_slab, jnp.float32)

    def _flatten(self, feature_list):
        # torch: flatten(stack(features, 0).transpose(1, 0), start_dim=1)
        gene_feat = jnp.stack(feature_list, axis=0)                 # (G, B, gene_dim)
        return jnp.transpose(gene_feat, (1, 0, 2)).reshape(gene_feat.shape[1], -1)

    def forward(self, feature_list):
        x_flat = self._flatten(feature_list)
        return fully_net_forward(x_flat, self.w_slab, self.p_slab,
                                 batch=x_flat.shape[0], hidden_n=self.hidden_n,
                                 batch_tile=self.batch_tile)

    def forward_ref(self, feature_list):
        """Pure-JAX reference (same bf16-matmul numerics) for correctness checks."""
        a = self._flatten(feature_list).astype(jnp.float32)
        for p in self.layers:
            y = jnp.dot(a.astype(jnp.bfloat16), p['w'].astype(jnp.bfloat16),
                        preferred_element_type=jnp.float32) + p['b']
            sp = jnp.where(y > SOFTPLUS_THRESHOLD, y, jnp.log1p(jnp.exp(y)))
            s = y * jnp.tanh(sp)
            a = (s - p['mean']) / jnp.sqrt(p['var'] + BN_EPS) * p['gamma'] + p['beta']
        return a


if __name__ == "__main__":
    # Small deterministic example consistent with FullyNet.forward:
    #   8 genes x gene_feat=3 features -> flattened input_dim=24,
    #   4 fully-connected layers of width 32, batch=4.
    batch, n_genes, gene_dim = 4, 8, 3
    net = FullyNetPallas(n_genes=n_genes, gene_dim=gene_dim, hidden_n=32,
                         layer_n=4, output_dim=2, dropout_p=0.1,
                         key=jax.random.PRNGKey(42))

    x = jax.random.normal(jax.random.PRNGKey(0), (n_genes, batch, gene_dim), jnp.float32)
    feature_list = [x[g] for g in range(n_genes)]   # list of (batch, gene_dim), as in torch

    out = net.forward(feature_list)
    out = jax.block_until_ready(out)

    ref = jax.block_until_ready(net.forward_ref(feature_list))
    assert out.shape == (batch, net.hidden_n), out.shape
    np.testing.assert_allclose(np.asarray(out), np.asarray(ref), rtol=2e-3, atol=2e-3)
    print("KERNEL_OK")
</pallas_src>

<mosaic_0001>
module attributes {stable_mosaic.version = 11 : i64} {
  func.func @_fully_chain_kernel(%arg0: i32, %arg1: i32, %arg2: memref<8x128xf32, #tpu.memory_space<vmem>>, %arg3: memref<1x128x128xbf16, #tpu.memory_space<vmem>>, %arg4: memref<1x8x128xf32, #tpu.memory_space<vmem>>, %arg5: memref<8x128xf32, #tpu.memory_space<vmem>>, %arg6: memref<8x128xf32, #tpu.memory_space<vmem>>) attributes {dimension_semantics = [#tpu.dimension_semantics<parallel>, #tpu.dimension_semantics<arbitrary>], iteration_bounds = array<i64: 1, 4>, scalar_prefetch = 0 : i64, scratch_operands = 1 : i64, tpu.core_type = #tpu.core_type<tc>, window_params = [{transform_indices = @transform_0, window_bounds = array<i64: 8, 128>}, {transform_indices = @transform_1, window_bounds = array<i64: 1, 128, 128>}, {transform_indices = @transform_2, window_bounds = array<i64: 1, 8, 128>}, {transform_indices = @transform_3, window_bounds = array<i64: 8, 128>}]} {
    %c0_i32 = arith.constant 0 : i32
    %0 = arith.cmpi eq, %arg1, %c0_i32 : i32
    %1 = arith.extui %0 : i1 to i32
    %c0_i32_0 = arith.constant 0 : i32
    %2 = arith.cmpi ne, %1, %c0_i32_0 : i32
    scf.if %2 {
      %c0_16 = arith.constant 0 : index
      %c0_17 = arith.constant 0 : index
      %31 = vector.load %arg2[%c0_16, %c0_17] : memref<8x128xf32, #tpu.memory_space<vmem>>, vector<8x128xf32>
      %c0_18 = arith.constant 0 : index
      %c0_19 = arith.constant 0 : index
      %32 = vector.load %arg6[%c0_18, %c0_19] : memref<8x128xf32, #tpu.memory_space<vmem>>, vector<8x128xf32>
      tpu.vector_store %arg6[%c0_18, %c0_19], %31 {strides = array<i32>} : memref<8x128xf32, #tpu.memory_space<vmem>>, vector<8x128xf32>,
    } else {
    }
    %c0 = arith.constant 0 : index
    %c0_1 = arith.constant 0 : index
    %3 = vector.load %arg6[%c0, %c0_1] : memref<8x128xf32, #tpu.memory_space<vmem>>, vector<8x128xf32>
    %4 = arith.truncf %3 : vector<8x128xf32> to vector<8x128xbf16>
    %c0_2 = arith.constant 0 : index
    %c0_3 = arith.constant 0 : index
    %c0_4 = arith.constant 0 : index
    %5 = vector.load %arg3[%c0_2, %c0_3, %c0_4] : memref<1x128x128xbf16, #tpu.memory_space<vmem>>, vector<1x128x128xbf16>
    %6 = vector.shape_cast %5 : vector<1x128x128xbf16> to vector<128x128xbf16>
    %cst = arith.constant dense<0.000000e+00> : vector<8x128xf32>
    %7 = tpu.matmul %4, %6, %cst {dimension_numbers = #tpu.dot_dimension_numbers<[1], [0], [0], [1], [0, 0, 1, 1], [], []>} : vector<8x128xbf16>, vector<128x128xbf16>, vector<8x128xf32> -> vector<8x128xf32>
    %c0_5 = arith.constant 0 : index
    %c0_6 = arith.constant 0 : index
    %c0_7 = arith.constant 0 : index
    %8 = vector.load %arg4[%c0_5, %c0_6, %c0_7] : memref<1x8x128xf32, #tpu.memory_space<vmem>>, vector<1x1x128xf32>
    %9 = vector.shape_cast %8 : vector<1x1x128xf32> to vector<1x128xf32>
    %10 = vector.broadcast %9 : vector<1x128xf32> to vector<8x128xf32>
    %11 = arith.addf %7, %10 : vector<8x128xf32>
    %cst_8 = arith.constant 2.000000e+01 : f32
    %12 = vector.broadcast %cst_8 : f32 to vector<8x128xf32>
    %13 = arith.cmpf ogt, %11, %12 : vector<8x128xf32>
    %14 = math.exp %11 : vector<8x128xf32>
    %15 = math.log1p %14 : vector<8x128xf32>
    %16 = arith.select %13, %11, %15 : vector<8x128xi1>, vector<8x128xf32>
    %17 = math.tanh %16 : vector<8x128xf32>
    %18 = arith.mulf %11, %17 : vector<8x128xf32>
    %c0_9 = arith.constant 0 : index
    %c1 = arith.constant 1 : index
    %c0_10 = arith.constant 0 : index
    %19 = vector.load %arg4[%c0_9, %c1, %c0_10] : memref<1x8x128xf32, #tpu.memory_space<vmem>>, vector<1x1x128xf32>
    %20 = vector.shape_cast %19 : vector<1x1x128xf32> to vector<1x128xf32>
    %21 = vector.broadcast %20 : vector<1x128xf32> to vector<8x128xf32>
    %22 = arith.mulf %18, %21 : vector<8x128xf32>
    %c0_11 = arith.constant 0 : index
    %c2 = arith.constant 2 : index
    %c0_12 = arith.constant 0 : index
    %23 = vector.load %arg4[%c0_11, %c2, %c0_12] : memref<1x8x128xf32, #tpu.memory_space<vmem>>, vector<1x1x128xf32>
    %24 = vector.shape_cast %23 : vector<1x1x128xf32> to vector<1x128xf32>
    %25 = vector.broadcast %24 : vector<1x128xf32> to vector<8x128xf32>
    %26 = arith.addf %22, %25 : vector<8x128xf32>
    %c0_13 = arith.constant 0 : index
    %c0_14 = arith.constant 0 : index
    %27 = vector.load %arg6[%c0_13, %c0_14] : memref<8x128xf32, #tpu.memory_space<vmem>>, vector<8x128xf32>
    tpu.vector_store %arg6[%c0_13, %c0_14], %26 {strides = array<i32>} : memref<8x128xf32, #tpu.memory_space<vmem>>, vector<8x128xf32>,
    %c3_i32 = arith.constant 3 : i32
    %28 = arith.cmpi eq, %arg1, %c3_i32 : i32
    %29 = arith.extui %28 : i1 to i32
    %c0_i32_15 = arith.constant 0 : i32
    %30 = arith.cmpi ne, %29, %c0_i32_15 : i32
    scf.if %30 {
      %c0_16 = arith.constant 0 : index
      %c0_17 = arith.constant 0 : index
      %31 = vector.load %arg5[%c0_16, %c0_17] : memref<8x128xf32, #tpu.memory_space<vmem>>, vector<8x128xf32>
      tpu.vector_store %arg5[%c0_16, %c0_17], %26 {strides = array<i32>} : memref<8x128xf32, #tpu.memory_space<vmem>>, vector<8x128xf32>,
    } else {
    }
    return
  }
  func.func @transform_0(%arg0: i32, %arg1: i32) -> (i32, i32) {
    %c0_i32 = arith.constant 0 : i32
    %c0_i32_0 = arith.constant 0 : i32
    return %arg0, %c0_i32 : i32, i32
  }
  func.func @transform_1(%arg0: i32, %arg1: i32) -> (i32, i32, i32) {
    %c0_i32 = arith.constant 0 : i32
    %c0_i32_0 = arith.constant 0 : i32
    %c0_i32_1 = arith.constant 0 : i32
    return %arg1, %c0_i32, %c0_i32_0 : i32, i32, i32
  }
  func.func @transform_2(%arg0: i32, %arg1: i32) -> (i32, i32, i32) {
    %c0_i32 = arith.constant 0 : i32
    %c0_i32_0 = arith.constant 0 : i32
    %c0_i32_1 = arith.constant 0 : i32
    return %arg1, %c0_i32, %c0_i32_0 : i32, i32, i32
  }
  func.func @transform_3(%arg0: i32, %arg1: i32) -> (i32, i32) {
    %c0_i32 = arith.constant 0 : i32
    %c0_i32_0 = arith.constant 0 : i32
    return %arg0, %c0_i32 : i32, i32
  }
}

</mosaic_0001>

<llo_original>
// kernel: tpu_custom_call.1
$region0: #{tpu_custom_call.1}
  #allocation0 [shape = 'u32[]', space=smem, size = 0x4, offset = 0x4, fixed_abs, tag = 'smem constant byte address 0x4 - core index']
  #allocation1 [shape = 'u32[144,128]{1,0:T(1,128)}', space=vmem, size = 0x12000, scoped, tag = 'internal scratch']
  #allocation2 [shape = 'f32[8,128]{1,0:T(8,128)}', space=vmem, size = 0x1000, scoped, tag = 'scratch operand']
  %s0 = inlined_call_operand.hbm [shape: f32[8,128], index: 0, kind: input, shape index: {}]
  %s1 = inlined_call_operand.hbm [shape: bf16[4,128,128], index: 1, kind: input, shape index: {}]
  %s2 = inlined_call_operand.hbm [shape: f32[4,8,128], index: 2, kind: input, shape index: {}]
  %s3 = inlined_call_operand.hbm [shape: f32[8,128], index: 3, kind: output, shape index: {}]
  %s4 = sld [smem:[#allocation0]]
  $region65: #{tpu_custom_call.1} parent=0
    _
  %s6 = ssub.s32 1, %s4
  %s7 = scalar_select 0, %s6, %s4
  $region1: #{tpu_custom_call.1} parent=0
    #allocation3 [shape = 'u8[4096]{0}', space=vmem, size = 0x1000, scoped, tag = 'input window, operand 0, single buffered']
    #allocation4 [shape = 's32[2]{0}', space=sflag, size = 0x8, scoped, tag = 'scoped memory for tpu_custom_call.1']
    #allocation5 [shape = 's32[2]{0}', space=sflag, size = 0x8, scoped, tag = 'scoped memory for tpu_custom_call.1']
    #allocation6 [shape = 'u8[65536]{0}', space=vmem, size = 0x10000, scoped, tag = 'input window, operand 1']
    #allocation7 [shape = 's32[2]{0}', space=sflag, size = 0x8, scoped, tag = 'scoped memory for tpu_custom_call.1']
    #allocation8 [shape = 'u8[8192]{0}', space=vmem, size = 0x2000, scoped, tag = 'input window, operand 2']
    #allocation9 [shape = 'u8[4096]{0}', space=vmem, size = 0x1000, scoped, tag = 'output window, operand 0, single buffered']
    %8 = vsyncpa [#allocation4], 0
    %9 = vsyncpa [#allocation7], 0
    %s10 = scalar_lea.sflag [#allocation7], 1
    %11 = vsyncpa %s10, 0
    %12 = vsyncpa [#allocation5], 0
    loop: start=0, step=1, limit=6
    $region2: #{tpu_custom_call.1} parent=1 // loop_pre_header
      _
    $region3: #{tpu_custom_call.1} parent=1 // loop_header
      %s14 = sphi 0, %s18
      %p15 = scmp.ge.s32.totalorder %s14, 6
      %s21 = sphi 0, %s33
      %s22 = sphi 0, %s29
      %s23 = sphi 0, %s21
      %s24 = sphi 0, %s22
      %s25 = sphi 0, %s23
      %s26 = sphi 0, %s24
      %s36 = sphi 0, %s38
      %s39 = sphi 0, %s36
      %s40 = sphi 0, %s39
      %s56 = sphi 0, %s40
      %s62 = sphi 0, %s64
      %s65 = sphi 0, %s62
      %s66 = sphi 0, %s65
      %s82 = sphi 0, %s66
      %s88 = sphi 0, %s90
      %s91 = sphi 0, %s88
      %s92 = sphi 0, %s91
      %s108 = sphi 0, %s92
      %s114 = sphi 0, %s116
      %s117 = sphi 0, %s114
      %s118 = sphi 0, %s117
      %s134 = sphi 0, %s118
    $region4: #{tpu_custom_call.1} parent=1 // loop_header_branch
      %17 = sbr.rel (%p15) target = $region8
    $region5: #{tpu_custom_call.1} parent=1 // loop_body
      %s19 = ssub.s32 %s14, 1
      %s20 = ssub.s32 %s14, 2
      %s27 = sadd.s32 1, %s22
      %p28 = scmp.ge.s32.totalorder %s27, 4
      %s29 = scalar_select %p28, 0, %s27
      %s30 = sadd.s32 1, %s21
      %s31 = scalar_select %p28, %s30, %s21
      %p32 = scmp.ge.s32.totalorder %s31, 1
      %s33 = scalar_select %p32, 0, %s31
      %s34 = ssub.s32 %s21, %s33
      %p35 = scmp.eq.s32.totalorder %s34, 0
      %s37 = sadd.s32 %s36, 1
      %s38 = scalar_select %p35, %s36, %s37
      %p41 = pneg %p35
      %p42 = scmp.eq.s32.totalorder %s14, 3
      %p43 = por %p41, %p42
      %p44 = scmp.ne.s32.totalorder %s36, %s39
      %p45 = scmp.eq.s32.totalorder %s14, 0
      %p46 = por %p44, %p45
      %p47 = scmp.ne.s32.totalorder %s36, %s39
      %p48 = scmp.eq.s32.totalorder %s19, 3
      %p49 = por %p47, %p48
      %p50 = scmp.ne.s32.totalorder %s39, %s40
      %p51 = scmp.eq.s32.totalorder %s19, 0
      %p52 = por %p50, %p51
      %p53 = scmp.ne.s32.totalorder %s39, %s40
      %p54 = scmp.eq.s32.totalorder %s20, 3
      %p55 = por %p53, %p54
      %p57 = scmp.ne.s32.totalorder %s40, %s56
      %p58 = scmp.eq.s32.totalorder %s20, 0
      %p59 = por %p57, %p58
      %s60 = ssub.s32 %s22, %s29
      %p61 = scmp.eq.s32.totalorder %s60, 0
      %s63 = sadd.s32 %s62, 1
      %s64 = scalar_select %p61, %s62, %s63
      %p67 = pneg %p61
      %p68 = scmp.eq.s32.totalorder %s14, 3
      %p69 = por %p67, %p68
      %p70 = scmp.ne.s32.totalorder %s62, %s65
      %p71 = scmp.eq.s32.totalorder %s14, 0
      %p72 = por %p70, %p71
      %p73 = scmp.ne.s32.totalorder %s62, %s65
      %p74 = scmp.eq.s32.totalorder %s19, 3
      %p75 = por %p73, %p74
      %p76 = scmp.ne.s32.totalorder %s65, %s66
      %p77 = scmp.eq.s32.totalorder %s19, 0
      %p78 = por %p76, %p77
      %p79 = scmp.ne.s32.totalorder %s65, %s66
      %p80 = scmp.eq.s32.totalorder %s20, 3
      %p81 = por %p79, %p80
      %p83 = scmp.ne.s32.totalorder %s66, %s82
      %p84 = scmp.eq.s32.totalorder %s20, 0
      %p85 = por %p83, %p84
      %s86 = ssub.s32 %s22, %s29
      %p87 = scmp.eq.s32.totalorder %s86, 0
      %s89 = sadd.s32 %s88, 1
      %s90 = scalar_select %p87, %s88, %s89
      %p93 = pneg %p87
      %p94 = scmp.eq.s32.totalorder %s14, 3
      %p95 = por %p93, %p94
      %p96 = scmp.ne.s32.totalorder %s88, %s91
      %p97 = scmp.eq.s32.totalorder %s14, 0
      %p98 = por %p96, %p97
      %p99 = scmp.ne.s32.totalorder %s88, %s91
      %p100 = scmp.eq.s32.totalorder %s19, 3
      %p101 = por %p99, %p100
      %p102 = scmp.ne.s32.totalorder %s91, %s92
      %p103 = scmp.eq.s32.totalorder %s19, 0
      %p104 = por %p102, %p103
      %p105 = scmp.ne.s32.totalorder %s91, %s92
      %p106 = scmp.eq.s32.totalorder %s20, 3
      %p107 = por %p105, %p106
      %p109 = scmp.ne.s32.totalorder %s92, %s108
      %p110 = scmp.eq.s32.totalorder %s20, 0
      %p111 = por %p109, %p110
      %s112 = ssub.s32 %s21, %s33
      %p113 = scmp.eq.s32.totalorder %s112, 0
      %s115 = sadd.s32 %s114, 1
      %s116 = scalar_select %p113, %s114, %s115
      %p119 = pneg %p113
      %p120 = scmp.eq.s32.totalorder %s14, 3
      %p121 = por %p119, %p120
      %p122 = scmp.ne.s32.totalorder %s114, %s117
      %p123 = scmp.eq.s32.totalorder %s14, 0
      %p124 = por %p122, %p123
      %p125 = scmp.ne.s32.totalorder %s114, %s117
      %p126 = scmp.eq.s32.totalorder %s19, 3
      %p127 = por %p125, %p126
      %p128 = scmp.ne.s32.totalorder %s117, %s118
      %p129 = scmp.eq.s32.totalorder %s19, 0
      %p130 = por %p128, %p129
      %p131 = scmp.ne.s32.totalorder %s117, %s118
      %p132 = scmp.eq.s32.totalorder %s20, 3
      %p133 = por %p131, %p132
      %p135 = scmp.ne.s32.totalorder %s118, %s134
      %p136 = scmp.eq.s32.totalorder %s20, 0
      %p137 = por %p135, %p136
      %p138 = scmp.le.s32.totalorder 1, %s14
      %p139 = scmp.lt.s32.totalorder %s14, 5
      %p140 = pnand %p138, %p139
      %p141 = pneg %p140
      // Predicated region
      $region9: #{tpu_custom_call.1} parent=5 // pred_check
        _
      $region10: #{tpu_custom_call.1} parent=5 // pred_check_branch
        %143 = sbr.rel (%p140) target = $region12
      $region11: #{tpu_custom_call.1} parent=5 // pred_region
        %s144 = ssub.s32 %s14, 1
        // Predicated region
        $region13: #{tpu_custom_call.1} parent=11 // pred_check
          %p145 = pneg %p52
        $region14: #{tpu_custom_call.1} parent=11 // pred_check_branch
          %147 = sbr.rel (%p145) target = $region16
        $region15: #{tpu_custom_call.1} parent=11 // pred_region
          %s149 = ssub.s32 128, 128
          %150 = vsyncadd [#allocation4], %s149
          %s151 = smul.addr %s23, 128
          %s152 = scalar_lea.hbm %s0, %s151
          %s154 = sshll.u32 [#allocation3], 4
          %s155 = int_to_ptr.vmem [resolvable:$true] %s154
          %157 = dma.hbm_to_vmem [thread:$0]  %s152, 128, %s155, [#allocation4]
        $region16: #{tpu_custom_call.1} parent=11 // pred_fallthru
          _
      $region12: #{tpu_custom_call.1} parent=5 // pred_fallthru
        _
      %p158 = scmp.lt.s32.totalorder %s14, 4
      // Predicated region
      $region17: #{tpu_custom_call.1} parent=5 // pred_check
        %p159 = pneg %p158
      $region18: #{tpu_custom_call.1} parent=5 // pred_check_branch
        %161 = sbr.rel (%p159) target = $region20
      $region19: #{tpu_custom_call.1} parent=5 // pred_region
        // Predicated region
        $region21: #{tpu_custom_call.1} parent=19 // pred_check
          %p162 = pneg %p72
        $region22: #{tpu_custom_call.1} parent=19 // pred_check_branch
          %164 = sbr.rel (%p162) target = $region24
        $region23: #{tpu_custom_call.1} parent=19 // pred_region
          %s165 = sand.u32 %s14, 1
          %s166 = scalar_lea.sflag [#allocation7], %s165
          %s167 = sand.u32 %s62, 1
          %s168 = smul.addr %s167, 64
          %s169 = scalar_lea.vmem [#allocation6], %s168
          %s171 = ssub.s32 1024, 1024
          %172 = vsyncadd %s166, %s171
          %s173 = smul.addr %s22, 16
          %s174 = smul.addr %s173, 64
          %s175 = scalar_lea.hbm %s1, %s174
          %s176 = sshll.u32 %s169, 4
          %s177 = int_to_ptr.vmem [resolvable:$true] %s176
          %182 = dma.hbm_to_vmem [thread:$0]  %s175, 1024, %s177, %s166, 64, 64, 4
        $region24: #{tpu_custom_call.1} parent=19 // pred_fallthru
          _
        // Predicated region
        $region25: #{tpu_custom_call.1} parent=19 // pred_check
          %p183 = pneg %p98
        $region26: #{tpu_custom_call.1} parent=19 // pred_check_branch
          %185 = sbr.rel (%p183) target = $region28
        $region27: #{tpu_custom_call.1} parent=19 // pred_region
          %s186 = sand.u32 %s14, 1
          %s187 = scalar_lea.sflag [#allocation7], %s186
          %s188 = sand.u32 %s88, 1
          %s189 = smul.addr %s188, 8
          %s190 = scalar_lea.vmem [#allocation8], %s189
          %s192 = ssub.s32 128, 128
          %193 = vsyncadd %s187, %s192
          %s194 = smul.addr %s22, 128
          %s195 = scalar_lea.hbm %s2, %s194
          %s197 = sshll.u32 %s190, 4
          %s198 = int_to_ptr.vmem [resolvable:$true] %s197
          %200 = dma.hbm_to_vmem [thread:$0]  %s195, 128, %s198, %s187
        $region28: #{tpu_custom_call.1} parent=19 // pred_fallthru
          _
      $region20: #{tpu_custom_call.1} parent=5 // pred_fallthru
        _
      %p201 = scmp.le.s32.totalorder 1, %s14
      %p202 = scmp.lt.s32.totalorder %s14, 5
      %p203 = pnand %p201, %p202
      %p204 = pneg %p203
      // Predicated region
      $region29: #{tpu_custom_call.1} parent=5 // pred_check
        _
      $region30: #{tpu_custom_call.1} parent=5 // pred_check_branch
        %206 = sbr.rel (%p203) target = $region32
      $region31: #{tpu_custom_call.1} parent=5 // pred_region
        %s207 = ssub.s32 %s14, 1
        // Predicated region
        $region33: #{tpu_custom_call.1} parent=31 // pred_check
          %p208 = pneg %p52
        $region34: #{tpu_custom_call.1} parent=31 // pred_check_branch
          %210 = sbr.rel (%p208) target = $region36
        $region35: #{tpu_custom_call.1} parent=31 // pred_region
          %211 = dma.done [#allocation4], 128
        $region36: #{tpu_custom_call.1} parent=31 // pred_fallthru
          _
        %s212 = sand.u32 %s19, 1
        %s213 = scalar_lea.sflag [#allocation7], %s212
        %s214 = sand.u32 %s65, 1
        %s215 = smul.addr %s214, 64
        %s216 = scalar_lea.vmem [#allocation6], %s215
        // Predicated region
        $region37: #{tpu_custom_call.1} parent=31 // pred_check
          %p217 = pneg %p78
        $region38: #{tpu_custom_call.1} parent=31 // pred_check_branch
          %219 = sbr.rel (%p217) target = $region40
        $region39: #{tpu_custom_call.1} parent=31 // pred_region
          %220 = dma.done %s213, 1024
        $region40: #{tpu_custom_call.1} parent=31 // pred_fallthru
          _
        %s221 = sand.u32 %s19, 1
        %s222 = scalar_lea.sflag [#allocation7], %s221
        %s223 = sand.u32 %s91, 1
        %s224 = smul.addr %s223, 8
        %s225 = scalar_lea.vmem [#allocation8], %s224
        // Predicated region
        $region41: #{tpu_custom_call.1} parent=31 // pred_check
          %p226 = pneg %p104
        $region42: #{tpu_custom_call.1} parent=31 // pred_check_branch
          %228 = sbr.rel (%p226) target = $region44
        $region43: #{tpu_custom_call.1} parent=31 // pred_region
          %229 = dma.done %s222, 128
        $region44: #{tpu_custom_call.1} parent=31 // pred_fallthru
          _
        %p230 = pneg %p52
        %p231 = pneg %p49
        %s232 = sand.u32 %s19, 1
        %s233 = scalar_lea.sflag [#allocation7], %s232
        %s234 = sand.u32 %s65, 1
        %s235 = smul.addr %s234, 64
        %s236 = scalar_lea.vmem [#allocation6], %s235
        %p237 = pneg %p78
        %p238 = pneg %p75
        %s239 = sand.u32 %s19, 1
        %s240 = scalar_lea.sflag [#allocation7], %s239
        %s241 = sand.u32 %s91, 1
        %s242 = smul.addr %s241, 8
        %s243 = scalar_lea.vmem [#allocation8], %s242
        %p244 = pneg %p104
        %p245 = pneg %p101
        %p246 = pneg %p130
        %p247 = pneg %p127
        %p249 = scmp.eq.s32.totalorder %s24, 0
        // Predicated region
        $region45: #{tpu_custom_call.1} parent=31 // pred_check
          %p250 = pneg %p249
        $region46: #{tpu_custom_call.1} parent=31 // pred_check_branch
          %252 = sbr.rel (%p250) target = $region48
        $region47: #{tpu_custom_call.1} parent=31 // pred_region
          %v253 = vld [vmem:[#allocation3] sm:$0xff]
          %254 = vst [vmem:[#allocation2] sm:$0xff] %v253
        $region48: #{tpu_custom_call.1} parent=31 // pred_fallthru
          _
        %v255 = vld [vmem:[#allocation2] sm:$0xff]
        %v256 = vpack.c.bf16 %v255, %v255
        %v257 = vld [vmem:[%s216] sm:$0xf]
        %v258 = vld [vmem:[%s216 + $0x4] sm:$0xf]
        %v259 = vld [vmem:[%s216 + $0x8] sm:$0xf]
        %v260 = vld [vmem:[%s216 + $0xc] sm:$0xf]
        %v261 = vld [vmem:[%s216 + $0x10] sm:$0xf]
        %v262 = vld [vmem:[%s216 + $0x14] sm:$0xf]
        %v263 = vld [vmem:[%s216 + $0x18] sm:$0xf]
        %v264 = vld [vmem:[%s216 + $0x1c] sm:$0xf]
        %v265 = vld [vmem:[%s216 + $0x20] sm:$0xf]
        %v266 = vld [vmem:[%s216 + $0x24] sm:$0xf]
        %v267 = vld [vmem:[%s216 + $0x28] sm:$0xf]
        %v268 = vld [vmem:[%s216 + $0x2c] sm:$0xf]
        %v269 = vld [vmem:[%s216 + $0x30] sm:$0xf]
        %v270 = vld [vmem:[%s216 + $0x34] sm:$0xf]
        %v271 = vld [vmem:[%s216 + $0x38] sm:$0xf]
        %v272 = vld [vmem:[%s216 + $0x3c] sm:$0xf]
        %v273 = vld [vmem:[%s225] sm:$0x1]
        %v274 = vlaneseq
        %v275 = vshrl.u32 %v274, 7
        %v276 = vsub.s32 0, %v275
        %v277 = vrot.slane %v273, %v276
        %v294 = vunpack.c.l.b16 %v257
        %v295 = vunpack.c.l.b16 %v258
        %v296 = vunpack.c.l.b16 %v259
        %v297 = vunpack.c.l.b16 %v260
        %v298 = vunpack.c.l.b16 %v261
        %v299 = vunpack.c.l.b16 %v262
        %v300 = vunpack.c.l.b16 %v263
        %v301 = vunpack.c.l.b16 %v264
        %v302 = vunpack.c.l.b16 %v265
        %v303 = vunpack.c.l.b16 %v266
        %v304 = vunpack.c.l.b16 %v267
        %v305 = vunpack.c.l.b16 %v268
        %v306 = vunpack.c.l.b16 %v269
        %v307 = vunpack.c.l.b16 %v270
        %v308 = vunpack.c.l.b16 %v271
        %v309 = vunpack.c.l.b16 %v272
        %v310 = vpack.c.b16 %v295, %v294
        %v311 = vpack.c.b16 %v297, %v296
        %v312 = vpack.c.b16 %v299, %v298
        %v313 = vpack.c.b16 %v301, %v300
        %v314 = vpack.c.b16 %v303, %v302
        %v315 = vpack.c.b16 %v305, %v304
        %v316 = vpack.c.b16 %v307, %v306
        %v317 = vpack.c.b16 %v309, %v308
        %326 = vmatprep.subr.bf16.mxu0 0
        %327 = vmatpush1.bf16.msra.mxu0 %v317
        %328 = vmatprep.subr.bf16.mxu0 0
        %329 = vmatpush1.bf16.msra.mxu0 %v316
        %330 = vmatprep.subr.bf16.mxu0 0
        %331 = vmatpush1.bf16.msra.mxu0 %v315
        %332 = vmatprep.subr.bf16.mxu0 0
        %333 = vmatpush1.bf16.msra.mxu0 %v314
        %334 = vmatprep.subr.bf16.mxu0 0
        %335 = vmatpush1.bf16.msra.mxu0 %v313
        %336 = vmatprep.subr.bf16.mxu0 0
        %337 = vmatpush1.bf16.msra.mxu0 %v312
        %338 = vmatprep.subr.bf16.mxu0 0
        %339 = vmatpush1.bf16.msra.mxu0 %v311
        %340 = vmatprep.subr.bf16.mxu0 0
        %341 = vmatpush1.bf16.msra.mxu0 %v310
        %342 = vmatprep.subr.bf16.mxu0 0
        %343 = vmatpush2.bf16.msra.mxu0 0
        %344 = vmatprep.subr.bf16.mxu0 0
        %345 = vmatpush2.bf16.msra.mxu0 0
        %346 = vmatprep.subr.bf16.mxu0 0
        %347 = vmatpush2.bf16.msra.mxu0 0
        %348 = vmatprep.subr.bf16.mxu0 0
        %349 = vmatpush2.bf16.msra.mxu0 0
        %350 = vmatprep.subr.bf16.mxu0 0
        %351 = vmatpush2.bf16.msra.mxu0 0
        %352 = vmatprep.subr.bf16.mxu0 0
        %353 = vmatpush2.bf16.msra.mxu0 0
        %354 = vmatprep.subr.bf16.mxu0 0
        %355 = vmatpush2.bf16.msra.mxu0 0
        %356 = vmatprep.subr.bf16.mxu0 0
        %357 = vmatpush2.bf16.msra.mxu0 0
        %358 = vmatprep.mubr.bf16.mxu0 0
        %359 = vmatmul.mubr.bf16.gmra.mxu0 %v256
        %v360 = vpop.f32.mrf.mxu0
        %v361 = vadd.f32 %v277, %v360
        %v362 = vpop.f32.mrf.mxu0
        %v363 = vpop.f32.mrf.mxu0
        %v364 = vpop.f32.mrf.mxu0
        %365 = vdwg.mxu0
        %vm366 = vcmp.gt.f32.partialorder %v361, 20.0
        %v367 = vmul.f32 %v361, 1.442695
        %v368 = vpow.pop %v367
        %v369 = vadd.f32 %v368, 1.0
        %v370 = vlog2.pop %v369
        %v371 = vmul.f32 %v370, 0.6931472
        %v372 = vmul.f32 -0.5, %v368
        %v373 = vadd.f32 %v372, 1.0
        %v374 = vmul.f32 %v373, %v368
        %v375 = vand.u32 2147483647, %v368
        %vm376 = vcmp.lt.f32.partialorder %v375, 0.0004427343
        %v377 = vsel %vm376, %v374, %v371
        %v378 = vsel %vm366, %v361, %v377
        %v379 = vtanh.pop %v378
        %v380 = vmul.f32 %v361, %v379
        %v381 = vld [vmem:[%s225 + $0x1] sm:$0x1]
        %v382 = vlaneseq
        %v383 = vshrl.u32 %v382, 7
        %v384 = vsub.s32 0, %v383
        %v385 = vrot.slane %v381, %v384
        %v386 = vmul.f32 %v380, %v385
        %v387 = vld [vmem:[%s225 + $0x2] sm:$0x1]
        %v388 = vlaneseq
        %v389 = vshrl.u32 %v388, 7
        %v390 = vsub.s32 0, %v389
        %v391 = vrot.slane %v387, %v390
        %v392 = vadd.f32 %v386, %v391
        %393 = vst [vmem:[#allocation2] sm:$0xff] %v392
        %p394 = scmp.eq.s32.totalorder %s24, 3
        // Predicated region
        $region49: #{tpu_custom_call.1} parent=31 // pred_check
          %p395 = pneg %p394
        $region50: #{tpu_custom_call.1} parent=31 // pred_check_branch
          %397 = sbr.rel (%p395) target = $region52
        $region51: #{tpu_custom_call.1} parent=31 // pred_region
          %398 = vst [vmem:[#allocation9] sm:$0xff] %v392
        $region52: #{tpu_custom_call.1} parent=31 // pred_fallthru
          _
        // Predicated region
        $region53: #{tpu_custom_call.1} parent=31 // pred_check
          %p399 = pneg %p127
        $region54: #{tpu_custom_call.1} parent=31 // pred_check_branch
          %401 = sbr.rel (%p399) target = $region56
        $region55: #{tpu_custom_call.1} parent=31 // pred_region
          %s403 = ssub.s32 128, 128
          %404 = vsyncadd [#allocation5], %s403
          %s405 = smul.addr %s23, 128
          %s406 = scalar_lea.hbm %s3, %s405
          %s408 = sshll.u32 [#allocation9], 4
          %s409 = int_to_ptr.vmem [resolvable:$true] %s408
          %411 = dma.vmem_to_hbm [thread:$0]  %s409, 128, %s406, [#allocation5]
        $region56: #{tpu_custom_call.1} parent=31 // pred_fallthru
          _
        // Predicated region
        $region57: #{tpu_custom_call.1} parent=31 // pred_check
          %p412 = pneg %p127
        $region58: #{tpu_custom_call.1} parent=31 // pred_check_branch
          %414 = sbr.rel (%p412) target = $region60
        $region59: #{tpu_custom_call.1} parent=31 // pred_region
          %415 = dma.done [#allocation5], 128
        $region60: #{tpu_custom_call.1} parent=31 // pred_fallthru
          _
      $region32: #{tpu_custom_call.1} parent=5 // pred_fallthru
        _
      %p416 = scmp.le.s32.totalorder 2, %s14
      // Predicated region
      $region61: #{tpu_custom_call.1} parent=5 // pred_check
        %p417 = pneg %p416
      $region62: #{tpu_custom_call.1} parent=5 // pred_check_branch
        %419 = sbr.rel (%p417) target = $region64
      $region63: #{tpu_custom_call.1} parent=5 // pred_region
        %s420 = ssub.s32 %s14, 2
      $region64: #{tpu_custom_call.1} parent=5 // pred_fallthru
        _
    $region6: #{tpu_custom_call.1} parent=1 // loop_footer
      %s18 = sadd.s32 1, %s14
    $region7: #{tpu_custom_call.1} parent=1 // loop_footer_branch
      %13 = sbr.rel target = $region3
    $region8: #{tpu_custom_call.1} parent=1 // loop_exit
      _
    %421 = vsyncpa [#allocation4], 1
    %s422 = scalar_lea.sflag [#allocation4], 1
    %423 = vsyncpa %s422, 1
    %424 = vsyncpa [#allocation7], 1
    %s425 = scalar_lea.sflag [#allocation7], 1
    %426 = vsyncpa %s425, 1
    %427 = vsyncpa [#allocation5], 1
    %s428 = scalar_lea.sflag [#allocation5], 1
    %429 = vsyncpa %s428, 1

</llo_original>
